<compile_context>
chip_gen: v6e
topology: v6e:2x2x1
jax: 0.10.0
libtpu: 0.0.40
codegen_flags: <defaults>
</compile_context>

<pallas_src>
import functools

import jax
import jax.numpy as jnp
from jax.experimental import pallas as pl
from jax.experimental.pallas import tpu as pltpu

LANE = 128
VMEM_LIMIT = 48 * 1024 * 1024  # fits v7x (64 MiB physical) with headroom; > v5e default


def _round_up(a, m):
    return ((a + m - 1) // m) * m


# ----------------------------------------------------------- pre-pass: support = x @ W
def support_kernel(x_ref, w_ref, s_ref):
    s_ref[...] = jnp.dot(
        x_ref[...], w_ref[...], preferred_element_type=jnp.float32
    ).astype(s_ref.dtype)


# ------------------------------------------------- main pass: out = adj @ support + b
def gcn_kernel(adj_ref, s_ref, b_ref, out_ref):
    @pl.when(pl.program_id(2) == 0)
    def _init():
        # Bias lives in the output tile from the start; k-steps just accumulate.
        out_ref[...] = jnp.broadcast_to(b_ref[...], out_ref.shape).astype(out_ref.dtype)

    # bf16 x bf16 on the MXU, f32 accumulation into the VMEM-resident output tile.
    out_ref[...] += jnp.dot(
        adj_ref[...], s_ref[...], preferred_element_type=jnp.float32
    )


@functools.partial(jax.jit, static_argnames=("tile_nodes",))
def graph_convolution(x, adj, weight, bias, *, tile_nodes=1024):
    """out = adj @ (x @ weight) + bias, tiled/pipelined Pallas TPU kernels."""
    N, in_f = x.shape
    out_f = weight.shape[1]

    in_pad = _round_up(in_f, LANE)
    out_pad = _round_up(out_f, LANE)

    # gj = 1 whenever possible so adj (the dominant HBM stream) is streamed once.
    tn = min(out_pad, 1024)
    while out_pad % tn:
        tn -= LANE

    # Node tile: as large as reasonable, but capped so gi >= 2 whenever N spans at
    # least two lane tiles (keeps both v7x TensorCores busy on the "parallel" i axis).
    n128 = _round_up(N, LANE)
    tmk = _round_up(min(tile_nodes, n128), LANE)
    if n128 >= 2 * LANE:
        tmk = min(tmk, max(LANE, (n128 // 2) // LANE * LANE))
    n_pad = _round_up(N, tmk)

    gi = n_pad // tmk
    gj = out_pad // tn
    gk = n_pad // tmk

    # Zero-padding (sliced off at the end).  adj is cast to bf16 *before* padding;
    # typical adjacency entries ({0,1,2,...} counts / normalized weights) survive bf16
    # and the dominant HBM stream is halved.  Padded rows/cols are exactly zero.
    adj_p = jnp.pad(adj.astype(jnp.bfloat16), ((0, n_pad - N), (0, n_pad - N)))
    x_p = jnp.pad(x.astype(jnp.float32), ((0, n_pad - N), (0, in_pad - in_f)))
    w_p = jnp.pad(weight.astype(jnp.float32),
                  ((0, in_pad - in_f), (0, out_pad - out_f)))
    b_p = jnp.pad(bias.astype(jnp.float32),
                  (0, out_pad - out_f)).reshape(1, out_pad)

    # ---- pre-pass: support = x @ W (tiny matmul, hoisted out of the adj reduction) --
    support = pl.pallas_call(
        support_kernel,
        out_shape=jax.ShapeDtypeStruct((n_pad, out_pad), jnp.bfloat16),
        grid_spec=pltpu.PrefetchScalarGridSpec(
            num_scalar_prefetch=0,
            grid=(gi,),
            in_specs=[
                pl.BlockSpec((tmk, in_pad), lambda i: (i, 0)),      # x row block
                pl.BlockSpec((in_pad, out_pad), lambda i: (0, 0)),  # full W
            ],
            out_specs=pl.BlockSpec((tmk, out_pad), lambda i: (i, 0)),
        ),
        compiler_params=pltpu.CompilerParams(
            dimension_semantics=("parallel",),
            vmem_limit_bytes=VMEM_LIMIT,
        ),
    )(x_p, w_p)

    # ---- main pass: out = adj @ support + bias ---------------------------------------
    out_padded = pl.pallas_call(
        gcn_kernel,
        out_shape=jax.ShapeDtypeStruct((n_pad, out_pad), jnp.float32),
        grid_spec=pltpu.PrefetchScalarGridSpec(
            num_scalar_prefetch=0,
            grid=(gi, gj, gk),
            in_specs=[
                pl.BlockSpec((tmk, tmk), lambda i, j, k: (i, k)),  # adj tile (bf16)
                pl.BlockSpec((tmk, tn), lambda i, j, k: (k, j)),   # support tile (bf16)
                pl.BlockSpec((1, tn), lambda i, j, k: (0, j)),     # bias row (f32)
            ],
            out_specs=pl.BlockSpec((tmk, tn), lambda i, j, k: (i, j)),
        ),
        compiler_params=pltpu.CompilerParams(
            dimension_semantics=("parallel", "parallel", "arbitrary"),
            vmem_limit_bytes=VMEM_LIMIT,
        ),
    )(adj_p, support, b_p)

    return out_padded[:N, :out_f]


if __name__ == "__main__":
    key = jax.random.PRNGKey(0)
    k_x, k_adj, k_w = jax.random.split(key, 3)

    # Small, module-consistent shapes.  N is deliberately NOT a tile multiple so the
    # zero-padding and the k-accumulation (2x1x2 grid after the gi>=2 cap) are
    # actually exercised.
    N = 200           # number of graph nodes
    in_features = 32
    out_features = 16

    x = jax.random.normal(k_x, (N, in_features), dtype=jnp.float32)

    # Dense symmetric "adjacency" (torch.sparse.mm semantics == dense matmul here);
    # entries in {0,1,2,3} are exact in bf16.
    a = (jax.random.uniform(k_adj, (N, N)) < 0.2).astype(jnp.float32)
    adj = a + a.T + jnp.eye(N, dtype=jnp.float32)

    # Parameters mirroring nn.init.xavier_normal_; bias made nonzero to exercise the
    # bias path (the module default init is 0.0, a special case).
    xavier_std = (2.0 / (in_features + out_features)) ** 0.5
    weight = xavier_std * jax.random.normal(
        k_w, (in_features, out_features), dtype=jnp.float32
    )
    bias = 0.1 * jnp.arange(out_features, dtype=jnp.float32)

    out = graph_convolution(x, adj, weight, bias)
    out = jax.block_until_ready(out)

    # Reference check in plain JAX (f32).  Tolerance reflects the deliberate bf16
    # storage of `support` (~2^-9 relative rounding) summed over ~70 neighbors per
    # node; adj values are exact in bf16 and all accumulation is f32.
    ref = adj @ (x @ weight) + bias
    err = float(jnp.max(jnp.abs(out - ref)))
    assert out.shape == (N, out_features)
    assert jnp.allclose(out, ref, atol=2.5e-1, rtol=2.5e-2), err

    print("KERNEL_OK")
</pallas_src>

<mosaic_0001>
module attributes {stable_mosaic.version = 11 : i64} {
  func.func @gcn_kernel(%arg0: i32, %arg1: i32, %arg2: i32, %arg3: memref<128x128xbf16, #tpu.memory_space<vmem>>, %arg4: memref<128x128xbf16, #tpu.memory_space<vmem>>, %arg5: memref<1x128xf32, #tpu.memory_space<vmem>>, %arg6: memref<128x128xf32, #tpu.memory_space<vmem>>) attributes {dimension_semantics = [#tpu.dimension_semantics<parallel>, #tpu.dimension_semantics<parallel>, #tpu.dimension_semantics<arbitrary>], iteration_bounds = array<i64: 2, 1, 2>, scalar_prefetch = 0 : i64, scratch_operands = 0 : i64, tpu.core_type = #tpu.core_type<tc>, window_params = [{transform_indices = @transform_0, window_bounds = array<i64: 128, 128>}, {transform_indices = @transform_1, window_bounds = array<i64: 128, 128>}, {transform_indices = @transform_2, window_bounds = array<i64: 1, 128>}, {transform_indices = @transform_3, window_bounds = array<i64: 128, 128>}]} {
    %c0_i32 = arith.constant 0 : i32
    %0 = arith.cmpi eq, %arg2, %c0_i32 : i32
    %1 = arith.extui %0 : i1 to i32
    %c0_i32_0 = arith.constant 0 : i32
    %2 = arith.cmpi ne, %1, %c0_i32_0 : i32
    scf.if %2 {
      %c0_8 = arith.constant 0 : index
      %c0_9 = arith.constant 0 : index
      %9 = vector.load %arg5[%c0_8, %c0_9] : memref<1x128xf32, #tpu.memory_space<vmem>>, vector<1x128xf32>
      %10 = vector.shape_cast %9 : vector<1x128xf32> to vector<1x128xf32>
      %11 = vector.broadcast %10 : vector<1x128xf32> to vector<128x128xf32>
      %c0_10 = arith.constant 0 : index
      %c0_11 = arith.constant 0 : index
      %12 = vector.load %arg6[%c0_10, %c0_11] : memref<128x128xf32, #tpu.memory_space<vmem>>, vector<128x128xf32>
      tpu.vector_store %arg6[%c0_10, %c0_11], %11 {strides = array<i32>} : memref<128x128xf32, #tpu.memory_space<vmem>>, vector<128x128xf32>,
    } else {
    }
    %c0 = arith.constant 0 : index
    %c0_1 = arith.constant 0 : index
    %3 = vector.load %arg6[%c0, %c0_1] : memref<128x128xf32, #tpu.memory_space<vmem>>, vector<128x128xf32>
    %c0_2 = arith.constant 0 : index
    %c0_3 = arith.constant 0 : index
    %4 = vector.load %arg3[%c0_2, %c0_3] : memref<128x128xbf16, #tpu.memory_space<vmem>>, vector<128x128xbf16>
    %c0_4 = arith.constant 0 : index
    %c0_5 = arith.constant 0 : index
    %5 = vector.load %arg4[%c0_4, %c0_5] : memref<128x128xbf16, #tpu.memory_space<vmem>>, vector<128x128xbf16>
    %cst = arith.constant dense<0.000000e+00> : vector<128x128xf32>
    %6 = tpu.matmul %4, %5, %cst {dimension_numbers = #tpu.dot_dimension_numbers<[1], [0], [0], [1], [0, 0, 1, 1], [], []>} : vector<128x128xbf16>, vector<128x128xbf16>, vector<128x128xf32> -> vector<128x128xf32>
    %7 = arith.addf %3, %6 : vector<128x128xf32>
    %c0_6 = arith.constant 0 : index
    %c0_7 = arith.constant 0 : index
    %8 = vector.load %arg6[%c0_6, %c0_7] : memref<128x128xf32, #tpu.memory_space<vmem>>, vector<128x128xf32>
    tpu.vector_store %arg6[%c0_6, %c0_7], %7 {strides = array<i32>} : memref<128x128xf32, #tpu.memory_space<vmem>>, vector<128x128xf32>,
    return
  }
  func.func @transform_0(%arg0: i32, %arg1: i32, %arg2: i32) -> (i32, i32) {
    %c0_i32 = arith.constant 0 : i32
    return %arg0, %arg2 : i32, i32
  }
  func.func @transform_1(%arg0: i32, %arg1: i32, %arg2: i32) -> (i32, i32) {
    %c0_i32 = arith.constant 0 : i32
    return %arg2, %arg1 : i32, i32
  }
  func.func @transform_2(%arg0: i32, %arg1: i32, %arg2: i32) -> (i32, i32) {
    %c0_i32 = arith.constant 0 : i32
    %c0_i32_0 = arith.constant 0 : i32
    return %c0_i32, %arg1 : i32, i32
  }
  func.func @transform_3(%arg0: i32, %arg1: i32, %arg2: i32) -> (i32, i32) {
    %c0_i32 = arith.constant 0 : i32
    return %arg0, %arg1 : i32, i32
  }
}

module attributes {stable_mosaic.version = 11 : i64} {
  func.func @support_kernel(%arg0: i32, %arg1: memref<128x128xf32, #tpu.memory_space<vmem>>, %arg2: memref<128x128xf32, #tpu.memory_space<vmem>>, %arg3: memref<128x128xbf16, #tpu.memory_space<vmem>>) attributes {dimension_semantics = [#tpu.dimension_semantics<parallel>], iteration_bounds = array<i64: 2>, scalar_prefetch = 0 : i64, scratch_operands = 0 : i64, tpu.core_type = #tpu.core_type<tc>, window_params = [{transform_indices = @transform_0, window_bounds = array<i64: 128, 128>}, {pipeline_mode = #tpu.pipeline_mode<synchronous>, transform_indices = @transform_1, window_bounds = array<i64: 128, 128>}, {transform_indices = @transform_2, window_bounds = array<i64: 128, 128>}]} {
    %c0 = arith.constant 0 : index
    %c0_0 = arith.constant 0 : index
    %0 = vector.load %arg1[%c0, %c0_0] : memref<128x128xf32, #tpu.memory_space<vmem>>, vector<128x128xf32>
    %c0_1 = arith.constant 0 : index
    %c0_2 = arith.constant 0 : index
    %1 = vector.load %arg2[%c0_1, %c0_2] : memref<128x128xf32, #tpu.memory_space<vmem>>, vector<128x128xf32>
    %cst = arith.constant dense<0.000000e+00> : vector<128x128xf32>
    %2 = tpu.matmul %0, %1, %cst {dimension_numbers = #tpu.dot_dimension_numbers<[1], [0], [0], [1], [0, 0, 1, 1], [], []>} : vector<128x128xf32>, vector<128x128xf32>, vector<128x128xf32> -> vector<128x128xf32>
    %3 = arith.truncf %2 : vector<128x128xf32> to vector<128x128xbf16>
    %c0_3 = arith.constant 0 : index
    %c0_4 = arith.constant 0 : index
    %4 = vector.load %arg3[%c0_3, %c0_4] : memref<128x128xbf16, #tpu.memory_space<vmem>>, vector<128x128xbf16>
    tpu.vector_store %arg3[%c0_3, %c0_4], %3 {strides = array<i32>} : memref<128x128xbf16, #tpu.memory_space<vmem>>, vector<128x128xbf16>,
    return
  }
  func.func @transform_0(%arg0: i32) -> (i32, i32) {
    %c0_i32 = arith.constant 0 : i32
    %c0_i32_0 = arith.constant 0 : i32
    return %arg0, %c0_i32 : i32, i32
  }
  func.func @transform_1(%arg0: i32) -> (i32, i32) {
    %c0_i32 = arith.constant 0 : i32
    %c0_i32_0 = arith.constant 0 : i32
    %c0_i32_1 = arith.constant 0 : i32
    return %c0_i32, %c0_i32_0 : i32, i32
  }
  func.func @transform_2(%arg0: i32) -> (i32, i32) {
    %c0_i32 = arith.constant 0 : i32
    %c0_i32_0 = arith.constant 0 : i32
    return %arg0, %c0_i32 : i32, i32
  }
}

</mosaic_0001>

<llo_original>
// kernel: graph_convolution.2
$region0: #{graph_convolution.2}
  #allocation0 [shape = 'u32[]', space=smem, size = 0x4, offset = 0x4, fixed_abs, tag = 'smem constant byte address 0x4 - core index']
  #allocation1 [shape = 'u32[144,128]{1,0:T(1,128)}', space=vmem, size = 0x12000, scoped, tag = 'internal scratch']
  %s0 = inlined_call_operand.vmem [shape: f32[256,128], index: 0, kind: input, shape index: {}]
  %s1 = inlined_call_operand.vmem [shape: f32[128,128], index: 1, kind: input, shape index: {}]
  %s2 = inlined_call_operand.vmem [shape: bf16[256,128], index: 2, kind: output, shape index: {}]
  %s3 = sld [smem:[#allocation0]]
  $region41: #{graph_convolution.2} parent=0
    _
  %s5 = ssub.s32 1, %s3
  %s6 = scalar_select 0, %s5, %s3
  loop: start=0, step=1, limit=4
  $region2: #{graph_convolution.2} parent=0 // loop_pre_header
    _
  $region3: #{graph_convolution.2} parent=0 // loop_header
    %s8 = sphi 0, %s12
    %p9 = scmp.ge.s32.totalorder %s8, 4
    %s18 = sphi 0, %s20
    %s21 = sphi 0, %s18
    %s22 = sphi 0, %s21
    %s38 = sphi 0, %s22
    %s42 = sphi 0, %s42
    %s44 = sphi 0, %s42
    %s45 = sphi 0, %s44
    %s59 = sphi 0, %s45
    %s65 = sphi 0, %s67
    %s68 = sphi 0, %s65
    %s69 = sphi 0, %s68
    %s85 = sphi 0, %s69
  $region4: #{graph_convolution.2} parent=0 // loop_header_branch
    %11 = sbr.rel (%p9) target = $region8
  $region5: #{graph_convolution.2} parent=0 // loop_body
    %s13 = ssub.s32 %s8, 1
    %s14 = ssub.s32 %s8, 2
    %s15 = sadd.s32 %s8, 1
    %s16 = ssub.s32 %s8, %s15
    %p17 = scmp.eq.s32.totalorder %s16, 0
    %s19 = sadd.s32 %s18, 1
    %s20 = scalar_select %p17, %s18, %s19
    %p23 = pneg %p17
    %p24 = scmp.eq.s32.totalorder %s8, 1
    %p25 = por %p23, %p24
    %p26 = scmp.ne.s32.totalorder %s18, %s21
    %p27 = scmp.eq.s32.totalorder %s8, 0
    %p28 = por %p26, %p27
    %p29 = scmp.ne.s32.totalorder %s18, %s21
    %p30 = scmp.eq.s32.totalorder %s13, 1
    %p31 = por %p29, %p30
    %p32 = scmp.ne.s32.totalorder %s21, %s22
    %p33 = scmp.eq.s32.totalorder %s13, 0
    %p34 = por %p32, %p33
    %p35 = scmp.ne.s32.totalorder %s21, %s22
    %p36 = scmp.eq.s32.totalorder %s14, 1
    %p37 = por %p35, %p36
    %p39 = scmp.ne.s32.totalorder %s22, %s38
    %p40 = scmp.eq.s32.totalorder %s14, 0
    %p41 = por %p39, %p40
    %s43 = sadd.s32 %s42, 1
    %p46 = scmp.eq.s32.totalorder %s8, 1
    %p47 = scmp.ne.s32.totalorder %s42, %s44
    %p48 = scmp.eq.s32.totalorder %s8, 0
    %p49 = por %p47, %p48
    %p50 = scmp.ne.s32.totalorder %s42, %s44
    %p51 = scmp.eq.s32.totalorder %s13, 1
    %p52 = por %p50, %p51
    %p53 = scmp.ne.s32.totalorder %s44, %s45
    %p54 = scmp.eq.s32.totalorder %s13, 0
    %p55 = por %p53, %p54
    %p56 = scmp.ne.s32.totalorder %s44, %s45
    %p57 = scmp.eq.s32.totalorder %s14, 1
    %p58 = por %p56, %p57
    %p60 = scmp.ne.s32.totalorder %s45, %s59
    %p61 = scmp.eq.s32.totalorder %s14, 0
    %p62 = por %p60, %p61
    %s63 = ssub.s32 %s8, %s15
    %p64 = scmp.eq.s32.totalorder %s63, 0
    %s66 = sadd.s32 %s65, 1
    %s67 = scalar_select %p64, %s65, %s66
    %p70 = pneg %p64
    %p71 = scmp.eq.s32.totalorder %s8, 1
    %p72 = por %p70, %p71
    %p73 = scmp.ne.s32.totalorder %s65, %s68
    %p74 = scmp.eq.s32.totalorder %s8, 0
    %p75 = por %p73, %p74
    %p76 = scmp.ne.s32.totalorder %s65, %s68
    %p77 = scmp.eq.s32.totalorder %s13, 1
    %p78 = por %p76, %p77
    %p79 = scmp.ne.s32.totalorder %s68, %s69
    %p80 = scmp.eq.s32.totalorder %s13, 0
    %p81 = por %p79, %p80
    %p82 = scmp.ne.s32.totalorder %s68, %s69
    %p83 = scmp.eq.s32.totalorder %s14, 1
    %p84 = por %p82, %p83
    %p86 = scmp.ne.s32.totalorder %s69, %s85
    %p87 = scmp.eq.s32.totalorder %s14, 0
    %p88 = por %p86, %p87
    %p89 = scmp.le.s32.totalorder 1, %s8
    %p90 = scmp.lt.s32.totalorder %s8, 3
    %p91 = pnand %p89, %p90
    %p92 = pneg %p91
    // Predicated region
    $region9: #{graph_convolution.2} parent=5 // pred_check
      _
    $region10: #{graph_convolution.2} parent=5 // pred_check_branch
      %94 = sbr.rel (%p91) target = $region12
    $region11: #{graph_convolution.2} parent=5 // pred_region
      %s95 = ssub.s32 %s8, 1
      // Predicated region
      $region13: #{graph_convolution.2} parent=11 // pred_check
        %p96 = pneg %p55
      $region14: #{graph_convolution.2} parent=11 // pred_check_branch
        %98 = sbr.rel (%p96) target = $region16
      $region15: #{graph_convolution.2} parent=11 // pred_region
        _
      $region16: #{graph_convolution.2} parent=11 // pred_fallthru
        _
    $region12: #{graph_convolution.2} parent=5 // pred_fallthru
      _
    %p99 = scmp.lt.s32.totalorder %s8, 2
    // Predicated region
    $region17: #{graph_convolution.2} parent=5 // pred_check
      %p100 = pneg %p99
    $region18: #{graph_convolution.2} parent=5 // pred_check_branch
      %102 = sbr.rel (%p100) target = $region20
    $region19: #{graph_convolution.2} parent=5 // pred_region
      // Predicated region
      $region21: #{graph_convolution.2} parent=19 // pred_check
        %p103 = pneg %p28
      $region22: #{graph_convolution.2} parent=19 // pred_check_branch
        %105 = sbr.rel (%p103) target = $region24
      $region23: #{graph_convolution.2} parent=19 // pred_region
        %s106 = smul.u32 16, %s8
        %p107 = scmp.lt.s32.totalorder %s106, 31
        %s108 = scalar_select %p107, %s106, 31
        %s109 = smul.addr %s108, 8
        %s110 = scalar_lea.vmem %s0, %s109
        %s111 = smul.u32 16, %s8
      $region24: #{graph_convolution.2} parent=19 // pred_fallthru
        _
    $region20: #{graph_convolution.2} parent=5 // pred_fallthru
      _
    %p112 = scmp.le.s32.totalorder 1, %s8
    %p113 = scmp.lt.s32.totalorder %s8, 3
    %p114 = pnand %p112, %p113
    %p115 = pneg %p114
    // Predicated region
    $region25: #{graph_convolution.2} parent=5 // pred_check
      _
    $region26: #{graph_convolution.2} parent=5 // pred_check_branch
      %117 = sbr.rel (%p114) target = $region28
    $region27: #{graph_convolution.2} parent=5 // pred_region
      %s118 = ssub.s32 %s8, 1
      %s119 = smul.u32 16, %s13
      %p120 = scmp.lt.s32.totalorder %s119, 31
      %s121 = scalar_select %p120, %s119, 31
      %s122 = smul.addr %s121, 8
      %s123 = scalar_lea.vmem %s0, %s122
      %p124 = pneg %p34
      %p125 = pneg %p31
      %p126 = pneg %p55
      %p127 = pneg %p52
      %p128 = pneg %p81
      %p129 = pneg %p78
      %s130 = smul.u32 16, %s13
      %p131 = scmp.lt.s32.totalorder %s130, 31
      %s132 = scalar_select %p131, %s130, 31
      %s133 = smul.addr %s132, 4
      %s134 = scalar_lea.vmem %s2, %s133
      %s135 = smul.u32 16, %s13
      %p136 = scmp.lt.s32.totalorder %s135, 31
      %s137 = scalar_select %p136, %s135, 31
      %s138 = smul.addr %s137, 8
      %s139 = scalar_lea.vmem %s0, %s138
      %s140 = smul.u32 16, %s13
      %s141 = smul.u32 16, %s13
      %p142 = scmp.lt.s32.totalorder %s141, 31
      %s143 = scalar_select %p142, %s141, 31
      %s144 = smul.addr %s143, 4
      %s145 = scalar_lea.vmem %s2, %s144
      %s146 = smul.u32 16, %s13
      %v147 = vld [vmem:[%s139] sm:$0xff]
      %v148 = vld [vmem:[%s139 + $0x8] sm:$0xff]
      %v149 = vld [vmem:[%s139 + $0x10] sm:$0xff]
      %v150 = vld [vmem:[%s139 + $0x18] sm:$0xff]
      %v151 = vld [vmem:[%s139 + $0x20] sm:$0xff]
      %v152 = vld [vmem:[%s139 + $0x28] sm:$0xff]
      %v153 = vld [vmem:[%s139 + $0x30] sm:$0xff]
      %v154 = vld [vmem:[%s139 + $0x38] sm:$0xff]
      %v155 = vld [vmem:[%s139 + $0x40] sm:$0xff]
      %v156 = vld [vmem:[%s139 + $0x48] sm:$0xff]
      %v157 = vld [vmem:[%s139 + $0x50] sm:$0xff]
      %v158 = vld [vmem:[%s139 + $0x58] sm:$0xff]
      %v159 = vld [vmem:[%s139 + $0x60] sm:$0xff]
      %v160 = vld [vmem:[%s139 + $0x68] sm:$0xff]
      %v161 = vld [vmem:[%s139 + $0x70] sm:$0xff]
      %v162 = vld [vmem:[%s139 + $0x78] sm:$0xff]
      %v163 = vld [vmem:[%s1] sm:$0xff]
      %v164 = vld [vmem:[%s1 + $0x8] sm:$0xff]
      %v165 = vld [vmem:[%s1 + $0x10] sm:$0xff]
      %v166 = vld [vmem:[%s1 + $0x18] sm:$0xff]
      %v167 = vld [vmem:[%s1 + $0x20] sm:$0xff]
      %v168 = vld [vmem:[%s1 + $0x28] sm:$0xff]
      %v169 = vld [vmem:[%s1 + $0x30] sm:$0xff]
      %v170 = vld [vmem:[%s1 + $0x38] sm:$0xff]
      %v171 = vld [vmem:[%s1 + $0x40] sm:$0xff]
      %v172 = vld [vmem:[%s1 + $0x48] sm:$0xff]
      %v173 = vld [vmem:[%s1 + $0x50] sm:$0xff]
      %v174 = vld [vmem:[%s1 + $0x58] sm:$0xff]
      %v175 = vld [vmem:[%s1 + $0x60] sm:$0xff]
      %v176 = vld [vmem:[%s1 + $0x68] sm:$0xff]
      %v177 = vld [vmem:[%s1 + $0x70] sm:$0xff]
      %v178 = vld [vmem:[%s1 + $0x78] sm:$0xff]
      %179 = vmatprep.subr.mxu0 0.0
      %180 = vmatpush1.msra.mxu0 %v178
      %181 = vmatprep.subr.mxu0 0.0
      %182 = vmatpush1.msra.mxu0 %v177
      %183 = vmatprep.subr.mxu0 0.0
      %184 = vmatpush1.msra.mxu0 %v176
      %185 = vmatprep.subr.mxu0 0.0
      %186 = vmatpush1.msra.mxu0 %v175
      %187 = vmatprep.subr.mxu0 0.0
      %188 = vmatpush1.msra.mxu0 %v174
      %189 = vmatprep.subr.mxu0 0.0
      %190 = vmatpush1.msra.mxu0 %v173
      %191 = vmatprep.subr.mxu0 0.0
      %192 = vmatpush1.msra.mxu0 %v172
      %193 = vmatprep.subr.mxu0 0.0
      %194 = vmatpush1.msra.mxu0 %v171
      %195 = vmatprep.subr.mxu0 0.0
      %196 = vmatpush1.msra.mxu0 %v170
      %197 = vmatprep.subr.mxu0 0.0
      %198 = vmatpush1.msra.mxu0 %v169
      %199 = vmatprep.subr.mxu0 0.0
      %200 = vmatpush1.msra.mxu0 %v168
      %201 = vmatprep.subr.mxu0 0.0
      %202 = vmatpush1.msra.mxu0 %v167
      %203 = vmatprep.subr.mxu0 0.0
      %204 = vmatpush1.msra.mxu0 %v166
      %205 = vmatprep.subr.mxu0 0.0
      %206 = vmatpush1.msra.mxu0 %v165
      %207 = vmatprep.subr.mxu0 0.0
      %208 = vmatpush1.msra.mxu0 %v164
      %209 = vmatprep.subr.mxu0 0.0
      %210 = vmatpush1.msra.mxu0 %v163
      %211 = vmatprep.subr.mxu0 0.0
      %212 = vmatpush2.msra.mxu0 0.0
      %213 = vmatprep.subr.mxu0 0.0
      %214 = vmatpush2.msra.mxu0 0.0
      %215 = vmatprep.subr.mxu0 0.0
      %216 = vmatpush2.msra.mxu0 0.0
      %217 = vmatprep.subr.mxu0 0.0
      %218 = vmatpush2.msra.mxu0 0.0
      %219 = vmatprep.subr.mxu0 0.0
      %220 = vmatpush2.msra.mxu0 0.0
      %221 = vmatprep.subr.mxu0 0.0
      %222 = vmatpush2.msra.mxu0 0.0
      %223 = vmatprep.subr.mxu0 0.0
      %224 = vmatpush2.msra.mxu0 0.0
      %225 = vmatprep.subr.mxu0 0.0
      %226 = vmatpush2.msra.mxu0 0.0
      %227 = vmatprep.subr.mxu0 0.0
      %228 = vmatpush2.msra.mxu0 0.0
      %229 = vmatprep.subr.mxu0 0.0
      %230 = vmatpush2.msra.mxu0 0.0
      %231 = vmatprep.subr.mxu0 0.0
      %232 = vmatpush2.msra.mxu0 0.0
      %233 = vmatprep.subr.mxu0 0.0
      %234 = vmatpush2.msra.mxu0 0.0
      %235 = vmatprep.subr.mxu0 0.0
      %236 = vmatpush2.msra.mxu0 0.0
      %237 = vmatprep.subr.mxu0 0.0
      %238 = vmatpush2.msra.mxu0 0.0
      %239 = vmatprep.subr.mxu0 0.0
      %240 = vmatpush2.msra.mxu0 0.0
      %241 = vmatprep.subr.mxu0 0.0
      %242 = vmatpush2.msra.mxu0 0.0
      %243 = vmatprep.mubr.f32.mxu0 0.0
      %244 = vmatmul.mubr.f32.gmra.mxu0 %v147
      %v245 = vpop.f32.mrf.mxu0
      %v246 = vadd.f32 0.0, %v245
      %v247 = vpop.f32.mrf.mxu0
      %248 = vmatprep.mubr.f32.mxu0 0.0
      %249 = vmatmul.mubr.f32.gmra.mxu0 %v148
      %v250 = vpop.f32.mrf.mxu0
      %v251 = vadd.f32 0.0, %v250
      %v252 = vpop.f32.mrf.mxu0
      %253 = vmatprep.mubr.f32.mxu0 0.0
      %254 = vmatmul.mubr.f32.gmra.mxu0 %v149
      %v255 = vpop.f32.mrf.mxu0
      %v256 = vadd.f32 0.0, %v255
      %v257 = vpop.f32.mrf.mxu0
      %258 = vmatprep.mubr.f32.mxu0 0.0
      %259 = vmatmul.mubr.f32.gmra.mxu0 %v150
      %v260 = vpop.f32.mrf.mxu0
      %v261 = vadd.f32 0.0, %v260
      %v262 = vpop.f32.mrf.mxu0
      %263 = vmatprep.mubr.f32.mxu0 0.0
      %264 = vmatmul.mubr.f32.gmra.mxu0 %v151
      %v265 = vpop.f32.mrf.mxu0
      %v266 = vadd.f32 0.0, %v265
      %v267 = vpop.f32.mrf.mxu0
      %268 = vmatprep.mubr.f32.mxu0 0.0
      %269 = vmatmul.mubr.f32.gmra.mxu0 %v152
      %v270 = vpop.f32.mrf.mxu0
      %v271 = vadd.f32 0.0, %v270
      %v272 = vpop.f32.mrf.mxu0
      %273 = vmatprep.mubr.f32.mxu0 0.0
      %274 = vmatmul.mubr.f32.gmra.mxu0 %v153
      %v275 = vpop.f32.mrf.mxu0
      %v276 = vadd.f32 0.0, %v275
      %v277 = vpop.f32.mrf.mxu0
      %278 = vmatprep.mubr.f32.mxu0 0.0
      %279 = vmatmul.mubr.f32.gmra.mxu0 %v154
      %v280 = vpop.f32.mrf.mxu0
      %v281 = vadd.f32 0.0, %v280
      %v282 = vpop.f32.mrf.mxu0
      %283 = vmatprep.mubr.f32.mxu0 0.0
      %284 = vmatmul.mubr.f32.gmra.mxu0 %v155
      %v285 = vpop.f32.mrf.mxu0
      %v286 = vadd.f32 0.0, %v285
      %v287 = vpop.f32.mrf.mxu0
      %288 = vmatprep.mubr.f32.mxu0 0.0
      %289 = vmatmul.mubr.f32.gmra.mxu0 %v156
      %v290 = vpop.f32.mrf.mxu0
      %v291 = vadd.f32 0.0, %v290
      %v292 = vpop.f32.mrf.mxu0
      %293 = vmatprep.mubr.f32.mxu0 0.0
      %294 = vmatmul.mubr.f32.gmra.mxu0 %v157
      %v295 = vpop.f32.mrf.mxu0
      %v296 = vadd.f32 0.0, %v295
      %v297 = vpop.f32.mrf.mxu0
      %298 = vmatprep.mubr.f32.mxu0 0.0
      %299 = vmatmul.mubr.f32.gmra.mxu0 %v158
      %v300 = vpop.f32.mrf.mxu0
      %v301 = vadd.f32 0.0, %v300
      %v302 = vpop.f32.mrf.mxu0
      %303 = vmatprep.mubr.f32.mxu0 0.0
      %304 = vmatmul.mubr.f32.gmra.mxu0 %v159
      %v305 = vpop.f32.mrf.mxu0
      %v306 = vadd.f32 0.0, %v305
      %v307 = vpop.f32.mrf.mxu0
      %308 = vmatprep.mubr.f32.mxu0 0.0
      %309 = vmatmul.mubr.f32.gmra.mxu0 %v160
      %v310 = vpop.f32.mrf.mxu0
      %v311 = vadd.f32 0.0, %v310
      %v312 = vpop.f32.mrf.mxu0
      %313 = vmatprep.mubr.f32.mxu0 0.0
      %314 = vmatmul.mubr.f32.gmra.mxu0 %v161
      %v315 = vpop.f32.mrf.mxu0
      %v316 = vadd.f32 0.0, %v315
      %v317 = vpop.f32.mrf.mxu0
      %318 = vmatprep.mubr.f32.mxu0 0.0
      %319 = vmatmul.mubr.f32.gmra.mxu0 %v162
      %v320 = vpop.f32.mrf.mxu0
      %v321 = vadd.f32 0.0, %v320
      %v322 = vpop.f32.mrf.mxu0
      %323 = vdwg.mxu0
      %v324 = vpack.c.bf16 %v251, %v246
      %v325 = vpack.c.bf16 %v261, %v256
      %v326 = vpack.c.bf16 %v271, %v266
      %v327 = vpack.c.bf16 %v281, %v276
      %v328 = vpack.c.bf16 %v291, %v286
      %v329 = vpack.c.bf16 %v301, %v296
      %v330 = vpack.c.bf16 %v311, %v306
      %v331 = vpack.c.bf16 %v321, %v316
      %v340 = vunpack.c.l.b16 %v324
      %v341 = vunpack.c.h.b16 %v324
      %v342 = vunpack.c.l.b16 %v325
      %v343 = vunpack.c.h.b16 %v325
      %v344 = vunpack.c.l.b16 %v326
      %v345 = vunpack.c.h.b16 %v326
      %v346 = vunpack.c.l.b16 %v327
      %v347 = vunpack.c.h.b16 %v327
      %v348 = vunpack.c.l.b16 %v328
      %v349 = vunpack.c.h.b16 %v328
      %v350 = vunpack.c.l.b16 %v329
      %v351 = vunpack.c.h.b16 %v329
      %v352 = vunpack.c.l.b16 %v330
      %v353 = vunpack.c.h.b16 %v330
      %v354 = vunpack.c.l.b16 %v331
      %v355 = vunpack.c.h.b16 %v331
      %v356 = vpack.c.b16 %v340, %v340
      %v357 = vpack.c.b16 %v341, %v341
      %v358 = vpack.c.b16 %v342, %v342
      %v359 = vpack.c.b16 %v343, %v343
      %v360 = vpack.c.b16 %v344, %v344
      %v361 = vpack.c.b16 %v345, %v345
      %v362 = vpack.c.b16 %v346, %v346
      %v363 = vpack.c.b16 %v347, %v347
      %v364 = vpack.c.b16 %v348, %v348
      %v365 = vpack.c.b16 %v349, %v349
      %v366 = vpack.c.b16 %v350, %v350
      %v367 = vpack.c.b16 %v351, %v351
      %v368 = vpack.c.b16 %v352, %v352
      %v369 = vpack.c.b16 %v353, %v353
      %v370 = vpack.c.b16 %v354, %v354
      %v371 = vpack.c.b16 %v355, %v355
      %388 = vst [vmem:[%s145] sm:$0xf] %v356
      %389 = vst [vmem:[%s145 + $0x4] sm:$0xf] %v357
      %390 = vst [vmem:[%s145 + $0x8] sm:$0xf] %v358
      %391 = vst [vmem:[%s145 + $0xc] sm:$0xf] %v359
      %392 = vst [vmem:[%s145 + $0x10] sm:$0xf] %v360
      %393 = vst [vmem:[%s145 + $0x14] sm:$0xf] %v361
      %394 = vst [vmem:[%s145 + $0x18] sm:$0xf] %v362
      %395 = vst [vmem:[%s145 + $0x1c] sm:$0xf] %v363
      %396 = vst [vmem:[%s145 + $0x20] sm:$0xf] %v364
      %397 = vst [vmem:[%s145 + $0x24] sm:$0xf] %v365
      %398 = vst [vmem:[%s145 + $0x28] sm:$0xf] %v366
      %399 = vst [vmem:[%s145 + $0x2c] sm:$0xf] %v367
      %400 = vst [vmem:[%s145 + $0x30] sm:$0xf] %v368
      %401 = vst [vmem:[%s145 + $0x34] sm:$0xf] %v369
      %402 = vst [vmem:[%s145 + $0x38] sm:$0xf] %v370
      %403 = vst [vmem:[%s145 + $0x3c] sm:$0xf] %v371
      %s404 = smul.u32 16, %s13
      %p405 = scmp.lt.s32.totalorder %s404, 31
      %s406 = scalar_select %p405, %s404, 31
      %s407 = smul.addr %s406, 4
      %s408 = scalar_lea.vmem %s2, %s407
      // Predicated region
      $region29: #{graph_convolution.2} parent=27 // pred_check
        %p409 = pneg %p78
      $region30: #{graph_convolution.2} parent=27 // pred_check_branch
        %411 = sbr.rel (%p409) target = $region32
      $region31: #{graph_convolution.2} parent=27 // pred_region
        %s412 = smul.u32 16, %s13
      $region32: #{graph_convolution.2} parent=27 // pred_fallthru
        _
    $region28: #{graph_convolution.2} parent=5 // pred_fallthru
      _
    %p413 = scmp.le.s32.totalorder 2, %s8
    // Predicated region
    $region33: #{graph_convolution.2} parent=5 // pred_check
      %p414 = pneg %p413
    $region34: #{graph_convolution.2} parent=5 // pred_check_branch
      %416 = sbr.rel (%p414) target = $region36
    $region35: #{graph_convolution.2} parent=5 // pred_region
      %s417 = ssub.s32 %s8, 2
      // Predicated region
      $region37: #{graph_convolution.2} parent=35 // pred_check
        %p418 = pneg %p84
      $region38: #{graph_convolution.2} parent=35 // pred_check_branch
        %420 = sbr.rel (%p418) target = $region40
      $region39: #{graph_convolution.2} parent=35 // pred_region
        %s421 = smul.u32 16, %s14
        %p422 = scmp.lt.s32.totalorder %s421, 31
        %s423 = scalar_select %p422, %s421, 31
        %s424 = smul.addr %s423, 4
        %s425 = scalar_lea.vmem %s2, %s424
      $region40: #{graph_convolution.2} parent=35 // pred_fallthru
        _
    $region36: #{graph_convolution.2} parent=5 // pred_fallthru
      _
  $region6: #{graph_convolution.2} parent=0 // loop_footer
    %s12 = sadd.s32 1, %s8
  $region7: #{graph_convolution.2} parent=0 // loop_footer_branch
    %7 = sbr.rel target = $region3
  $region8: #{graph_convolution.2} parent=0 // loop_exit
    _

// kernel: graph_convolution.3
$region0: #{graph_convolution.3}
  #allocation0 [shape = 'u32[]', space=smem, size = 0x4, offset = 0x4, fixed_abs, tag = 'smem constant byte address 0x4 - core index']
  #allocation1 [shape = 'u32[144,128]{1,0:T(1,128)}', space=vmem, size = 0x12000, scoped, tag = 'internal scratch']
  %s0 = inlined_call_operand.vmem [shape: bf16[256,256], index: 0, kind: input, shape index: {}]
  %s1 = inlined_call_operand.vmem [shape: bf16[256,128], index: 1, kind: input, shape index: {}]
  %s2 = inlined_call_operand.vmem [shape: f32[1,128], index: 2, kind: input, shape index: {}]
  %s3 = inlined_call_operand.vmem [shape: f32[256,128], index: 3, kind: output, shape index: {}]
  %s4 = sld [smem:[#allocation0]]
  $region90: #{graph_convolution.3} parent=0
    _
  %s6 = ssub.s32 1, %s4
  %s7 = scalar_select 0, %s6, %s4
  $region1: #{graph_convolution.3} parent=0
    #allocation2 [shape = 'u8[65536]{0}', space=vmem, size = 0x10000, scoped, tag = 'input window, operand 0']
    loop: start=0, step=1, limit=6
    $region2: #{graph_convolution.3} parent=1 // loop_pre_header
      _
    $region3: #{graph_convolution.3} parent=1 // loop_header
      %s9 = sphi 0, %s13
      %p10 = scmp.ge.s32.totalorder %s9, 6
      %s16 = sphi 0, %s35
      %s17 = sphi 0, %s31
      %s18 = sphi 0, %s27
      %s19 = sphi 0, %s16
      %s20 = sphi 0, %s17
      %s21 = sphi 0, %s18
      %s22 = sphi 0, %s19
      %s23 = sphi 0, %s20
      %s24 = sphi 0, %s21
      %s40 = sphi 0, %s42
      %s43 = sphi 0, %s40
      %s44 = sphi 0, %s43
      %s60 = sphi 0, %s44
      %s68 = sphi 0, %s70
      %s71 = sphi 0, %s68
      %s72 = sphi 0, %s71
      %s88 = sphi 0, %s72
      %s94 = sphi 0, %s96
      %s97 = sphi 0, %s94
      %s98 = sphi 0, %s97
      %s114 = sphi 0, %s98
      %s122 = sphi 0, %s124
      %s125 = sphi 0, %s122
      %s126 = sphi 0, %s125
      %s142 = sphi 0, %s126
    $region4: #{graph_convolution.3} parent=1 // loop_header_branch
      %12 = sbr.rel (%p10) target = $region8
    $region5: #{graph_convolution.3} parent=1 // loop_body
      %s14 = ssub.s32 %s9, 1
      %s15 = ssub.s32 %s9, 2
      %s25 = sadd.s32 1, %s18
      %p26 = scmp.ge.s32.totalorder %s25, 2
      %s27 = scalar_select %p26, 0, %s25
      %s28 = sadd.s32 1, %s17
      %s29 = scalar_select %p26, %s28, %s17
      %p30 = scmp.ge.s32.totalorder %s29, 1
      %s31 = scalar_select %p30, 0, %s29
      %s32 = sadd.s32 1, %s16
      %s33 = scalar_select %p30, %s32, %s16
      %p34 = scmp.ge.s32.totalorder %s33, 2
      %s35 = scalar_select %p34, 0, %s33
      %s36 = ssub.s32 %s16, %s35
      %s37 = ssub.s32 %s18, %s27
      %s38 = sor.u32 %s36, %s37
      %p39 = scmp.eq.s32.totalorder %s38, 0
      %s41 = sadd.s32 %s40, 1
      %s42 = scalar_select %p39, %s40, %s41
      %p45 = pneg %p39
      %p46 = scmp.eq.s32.totalorder %s9, 3
      %p47 = por %p45, %p46
      %p48 = scmp.ne.s32.totalorder %s40, %s43
      %p49 = scmp.eq.s32.totalorder %s9, 0
      %p50 = por %p48, %p49
      %p51 = scmp.ne.s32.totalorder %s40, %s43
      %p52 = scmp.eq.s32.totalorder %s14, 3
      %p53 = por %p51, %p52
      %p54 = scmp.ne.s32.totalorder %s43, %s44
      %p55 = scmp.eq.s32.totalorder %s14, 0
      %p56 = por %p54, %p55
      %p57 = scmp.ne.s32.totalorder %s43, %s44
      %p58 = scmp.eq.s32.totalorder %s15, 3
      %p59 = por %p57, %p58
      %p61 = scmp.ne.s32.totalorder %s44, %s60
      %p62 = scmp.eq.s32.totalorder %s15, 0
      %p63 = por %p61, %p62
      %s64 = ssub.s32 %s18, %s27
      %s65 = ssub.s32 %s17, %s31
      %s66 = sor.u32 %s64, %s65
      %p67 = scmp.eq.s32.totalorder %s66, 0
      %s69 = sadd.s32 %s68, 1
      %s70 = scalar_select %p67, %s68, %s69
      %p73 = pneg %p67
      %p74 = scmp.eq.s32.totalorder %s9, 3
      %p75 = por %p73, %p74
      %p76 = scmp.ne.s32.totalorder %s68, %s71
      %p77 = scmp.eq.s32.totalorder %s9, 0
      %p78 = por %p76, %p77
      %p79 = scmp.ne.s32.totalorder %s68, %s71
      %p80 = scmp.eq.s32.totalorder %s14, 3
      %p81 = por %p79, %p80
      %p82 = scmp.ne.s32.totalorder %s71, %s72
      %p83 = scmp.eq.s32.totalorder %s14, 0
      %p84 = por %p82, %p83
      %p85 = scmp.ne.s32.totalorder %s71, %s72
      %p86 = scmp.eq.s32.totalorder %s15, 3
      %p87 = por %p85, %p86
      %p89 = scmp.ne.s32.totalorder %s72, %s88
      %p90 = scmp.eq.s32.totalorder %s15, 0
      %p91 = por %p89, %p90
      %s92 = ssub.s32 %s17, %s31
      %p93 = scmp.eq.s32.totalorder %s92, 0
      %s95 = sadd.s32 %s94, 1
      %s96 = scalar_select %p93, %s94, %s95
      %p99 = pneg %p93
      %p100 = scmp.eq.s32.totalorder %s9, 3
      %p101 = por %p99, %p100
      %p102 = scmp.ne.s32.totalorder %s94, %s97
      %p103 = scmp.eq.s32.totalorder %s9, 0
      %p104 = por %p102, %p103
      %p105 = scmp.ne.s32.totalorder %s94, %s97
      %p106 = scmp.eq.s32.totalorder %s14, 3
      %p107 = por %p105, %p106
      %p108 = scmp.ne.s32.totalorder %s97, %s98
      %p109 = scmp.eq.s32.totalorder %s14, 0
      %p110 = por %p108, %p109
      %p111 = scmp.ne.s32.totalorder %s97, %s98
      %p112 = scmp.eq.s32.totalorder %s15, 3
      %p113 = por %p111, %p112
      %p115 = scmp.ne.s32.totalorder %s98, %s114
      %p116 = scmp.eq.s32.totalorder %s15, 0
      %p117 = por %p115, %p116
      %s118 = ssub.s32 %s16, %s35
      %s119 = ssub.s32 %s17, %s31
      %s120 = sor.u32 %s118, %s119
      %p121 = scmp.eq.s32.totalorder %s120, 0
      %s123 = sadd.s32 %s122, 1
      %s124 = scalar_select %p121, %s122, %s123
      %p127 = pneg %p121
      %p128 = scmp.eq.s32.totalorder %s9, 3
      %p129 = por %p127, %p128
      %p130 = scmp.ne.s32.totalorder %s122, %s125
      %p131 = scmp.eq.s32.totalorder %s9, 0
      %p132 = por %p130, %p131
      %p133 = scmp.ne.s32.totalorder %s122, %s125
      %p134 = scmp.eq.s32.totalorder %s14, 3
      %p135 = por %p133, %p134
      %p136 = scmp.ne.s32.totalorder %s125, %s126
      %p137 = scmp.eq.s32.totalorder %s14, 0
      %p138 = por %p136, %p137
      %p139 = scmp.ne.s32.totalorder %s125, %s126
      %p140 = scmp.eq.s32.totalorder %s15, 3
      %p141 = por %p139, %p140
      %p143 = scmp.ne.s32.totalorder %s126, %s142
      %p144 = scmp.eq.s32.totalorder %s15, 0
      %p145 = por %p143, %p144
      %p146 = scmp.le.s32.totalorder 1, %s9
      %p147 = scmp.lt.s32.totalorder %s9, 5
      %p148 = pnand %p146, %p147
      %p149 = pneg %p148
      // Predicated region
      $region9: #{graph_convolution.3} parent=5 // pred_check
        _
      $region10: #{graph_convolution.3} parent=5 // pred_check_branch
        %151 = sbr.rel (%p148) target = $region12
      $region11: #{graph_convolution.3} parent=5 // pred_region
        %s152 = ssub.s32 %s9, 1
        // Predicated region
        $region13: #{graph_convolution.3} parent=11 // pred_check
          %p153 = pneg %p110
        $region14: #{graph_convolution.3} parent=11 // pred_check_branch
          %155 = sbr.rel (%p153) target = $region16
        $region15: #{graph_convolution.3} parent=11 // pred_region
          %p156 = scmp.lt.s32.totalorder %s20, 0
          %s157 = scalar_select %p156, %s20, 0
          %s158 = scalar_lea.vmem %s2, %s157
        $region16: #{graph_convolution.3} parent=11 // pred_fallthru
          _
      $region12: #{graph_convolution.3} parent=5 // pred_fallthru
        _
      %p159 = scmp.lt.s32.totalorder %s9, 4
      // Predicated region
      $region17: #{graph_convolution.3} parent=5 // pred_check
        %p160 = pneg %p159
      $region18: #{graph_convolution.3} parent=5 // pred_check_branch
        %162 = sbr.rel (%p160) target = $region20
      $region19: #{graph_convolution.3} parent=5 // pred_region
        // Predicated region
        $region21: #{graph_convolution.3} parent=19 // pred_check
          %p163 = pneg %p50
        $region22: #{graph_convolution.3} parent=19 // pred_check_branch
          %165 = sbr.rel (%p163) target = $region24
        $region23: #{graph_convolution.3} parent=19 // pred_region
          %s166 = sand.u32 %s40, 1
          %s167 = sand.u32 %s40, 1
          %s168 = smul.addr %s167, 64
          %s169 = scalar_lea.vmem [#allocation2], %s168
          %s170 = smul.u32 16, %s16
          %s171 = smul.addr %s170, 2
          %s172 = sadd.s32 %s18, %s171
          %s173 = smul.addr %s172, 4
          %s174 = scalar_lea.vmem %s0, %s173
          // Predicated region
          $region25: #{graph_convolution.3} parent=23 // pred_check
            _
          $region26: #{graph_convolution.3} parent=23 // pred_check_branch
            %176 = sbr.rel (0) target = $region28
          $region27: #{graph_convolution.3} parent=23 // pred_region
            // Predicated region
            $region29: #{graph_convolution.3} parent=27 // pred_check
              _
            $region30: #{graph_convolution.3} parent=27 // pred_check_branch
              %178 = sbr.rel target = $region32
            $region31: #{graph_convolution.3} parent=27 // pred_region
              // Predicated region
              $region44: #{graph_convolution.3} parent=31 // pred_check
                _
              $region45: #{graph_convolution.3} parent=31 // pred_check_branch
                %224 = sbr.rel (0) target = $region47
              $region46: #{graph_convolution.3} parent=31 // pred_region
                loop: start=0, step=1, limit=1
                $region48: #{graph_convolution.3} parent=46 // loop_pre_header
                  _
                $region49: #{graph_convolution.3} parent=46 // loop_header
                  %s226 = sphi 0, %s230
                  %p227 = scmp.ge.s32.totalorder %s226, 1
                  %s231 = sphi %s174, %s174
                  %s232 = sphi %s169, %s169
                $region50: #{graph_convolution.3} parent=46 // loop_header_branch
                  %229 = sbr.rel (%p227) target = $region54
                $region51: #{graph_convolution.3} parent=46 // loop_body
                  _
                $region52: #{graph_convolution.3} parent=46 // loop_footer
                  %s230 = sadd.s32 1, %s226
                $region53: #{graph_convolution.3} parent=46 // loop_footer_branch
                  %225 = sbr.rel target = $region49
                $region54: #{graph_convolution.3} parent=46 // loop_exit
                  _
                %s234 = ssub.s32 16, 1
                loop: start=0, step=1, limit=1
                $region55: #{graph_convolution.3} parent=46 // loop_pre_header
                  _
                $region56: #{graph_convolution.3} parent=46 // loop_header
                  %s236 = sphi 0, %s240
                  %p237 = scmp.ge.s32.totalorder %s236, 1
                  %s241 = sphi %s174, %s174
                  %s242 = sphi %s169, %s169
                $region57: #{graph_convolution.3} parent=46 // loop_header_branch
                  %239 = sbr.rel (%p237) target = $region61
                $region58: #{graph_convolution.3} parent=46 // loop_body
                  %v243 = vld [vmem:[%s241] sm:%s234]
                  %244 = vst [vmem:[%s242] sm:%s234] %v243
                  %v245 = vld [vmem:[%s241 + $0x8] sm:%s234]
                  %246 = vst [vmem:[%s242 + $0x4] sm:%s234] %v245
                  %v247 = vld [vmem:[%s241 + $0x10] sm:%s234]
                  %248 = vst [vmem:[%s242 + $0x8] sm:%s234] %v247
                  %v249 = vld [vmem:[%s241 + $0x18] sm:%s234]
                  %250 = vst [vmem:[%s242 + $0xc] sm:%s234] %v249
                  %v251 = vld [vmem:[%s241 + $0x20] sm:%s234]
                  %252 = vst [vmem:[%s242 + $0x10] sm:%s234] %v251
                  %v253 = vld [vmem:[%s241 + $0x28] sm:%s234]
                  %254 = vst [vmem:[%s242 + $0x14] sm:%s234] %v253
                  %v255 = vld [vmem:[%s241 + $0x30] sm:%s234]
                  %256 = vst [vmem:[%s242 + $0x18] sm:%s234] %v255
                  %v257 = vld [vmem:[%s241 + $0x38] sm:%s234]
                  %258 = vst [vmem:[%s242 + $0x1c] sm:%s234] %v257
                  %v259 = vld [vmem:[%s241 + $0x40] sm:%s234]
                  %260 = vst [vmem:[%s242 + $0x20] sm:%s234] %v259
                  %v261 = vld [vmem:[%s241 + $0x48] sm:%s234]
                  %262 = vst [vmem:[%s242 + $0x24] sm:%s234] %v261
                  %v263 = vld [vmem:[%s241 + $0x50] sm:%s234]
                  %264 = vst [vmem:[%s242 + $0x28] sm:%s234] %v263
                  %v265 = vld [vmem:[%s241 + $0x58] sm:%s234]
                  %266 = vst [vmem:[%s242 + $0x2c] sm:%s234] %v265
                  %v267 = vld [vmem:[%s241 + $0x60] sm:%s234]
                  %268 = vst [vmem:[%s242 + $0x30] sm:%s234] %v267
                  %v269 = vld [vmem:[%s241 + $0x68] sm:%s234]
                  %270 = vst [vmem:[%s242 + $0x34] sm:%s234] %v269
                  %v271 = vld [vmem:[%s241 + $0x70] sm:%s234]
                  %272 = vst [vmem:[%s242 + $0x38] sm:%s234] %v271
                  %v273 = vld [vmem:[%s241 + $0x78] sm:%s234]
                  %274 = vst [vmem:[%s242 + $0x3c] sm:%s234] %v273
                $region59: #{graph_convolution.3} parent=46 // loop_footer
                  %s240 = sadd.s32 1, %s236
                $region60: #{graph_convolution.3} parent=46 // loop_footer_branch
                  %235 = sbr.rel target = $region56
                $region61: #{graph_convolution.3} parent=46 // loop_exit
                  _
              $region47: #{graph_convolution.3} parent=31 // pred_fallthru
                _
            $region32: #{graph_convolution.3} parent=27 // pred_fallthru
              _
            // Predicated region
            $region33: #{graph_convolution.3} parent=27 // pred_check
              _
            $region34: #{graph_convolution.3} parent=27 // pred_check_branch
              %180 = sbr.rel (0) target = $region36
            $region35: #{graph_convolution.3} parent=27 // pred_region
              %s182 = ssub.s32 16, 1
              loop: start=0, step=1, limit=1
              $region37: #{graph_convolution.3} parent=35 // loop_pre_header
                _
              $region38: #{graph_convolution.3} parent=35 // loop_header
                %s184 = sphi 0, %s188
                %p185 = scmp.ge.s32.totalorder %s184, 1
                %s189 = sphi %s174, %s174
                %s190 = sphi %s169, %s169
              $region39: #{graph_convolution.3} parent=35 // loop_header_branch
                %187 = sbr.rel (%p185) target = $region43
              $region40: #{graph_convolution.3} parent=35 // loop_body
                %v191 = vld [vmem:[%s189] sm:%s182]
                %192 = vst [vmem:[%s190] sm:%s182] %v191
                %v193 = vld [vmem:[%s189 + $0x8] sm:%s182]
                %194 = vst [vmem:[%s190 + $0x4] sm:%s182] %v193
                %v195 = vld [vmem:[%s189 + $0x10] sm:%s182]
                %196 = vst [vmem:[%s190 + $0x8] sm:%s182] %v195
                %v197 = vld [vmem:[%s189 + $0x18] sm:%s182]
                %198 = vst [vmem:[%s190 + $0xc] sm:%s182] %v197
                %v199 = vld [vmem:[%s189 + $0x20] sm:%s182]
                %200 = vst [vmem:[%s190 + $0x10] sm:%s182] %v199
                %v201 = vld [vmem:[%s189 + $0x28] sm:%s182]
                %202 = vst [vmem:[%s190 + $0x14] sm:%s182] %v201
                %v203 = vld [vmem:[%s189 + $0x30] sm:%s182]
                %204 = vst [vmem:[%s190 + $0x18] sm:%s182] %v203
                %v205 = vld [vmem:[%s189 + $0x38] sm:%s182]
                %206 = vst [vmem:[%s190 + $0x1c] sm:%s182] %v205
                %v207 = vld [vmem:[%s189 + $0x40] sm:%s182]
                %208 = vst [vmem:[%s190 + $0x20] sm:%s182] %v207
                %v209 = vld [vmem:[%s189 + $0x48] sm:%s182]
                %210 = vst [vmem:[%s190 + $0x24] sm:%s182] %v209
                %v211 = vld [vmem:[%s189 + $0x50] sm:%s182]
                %212 = vst [vmem:[%s190 + $0x28] sm:%s182] %v211
                %v213 = vld [vmem:[%s189 + $0x58] sm:%s182]
                %214 = vst [vmem:[%s190 + $0x2c] sm:%s182] %v213
                %v215 = vld [vmem:[%s189 + $0x60] sm:%s182]
                %216 = vst [vmem:[%s190 + $0x30] sm:%s182] %v215
                %v217 = vld [vmem:[%s189 + $0x68] sm:%s182]
                %218 = vst [vmem:[%s190 + $0x34] sm:%s182] %v217
                %v219 = vld [vmem:[%s189 + $0x70] sm:%s182]
                %220 = vst [vmem:[%s190 + $0x38] sm:%s182] %v219
                %v221 = vld [vmem:[%s189 + $0x78] sm:%s182]
                %222 = vst [vmem:[%s190 + $0x3c] sm:%s182] %v221
              $region41: #{graph_convolution.3} parent=35 // loop_footer
                %s188 = sadd.s32 1, %s184
              $region42: #{graph_convolution.3} parent=35 // loop_footer_branch
                %183 = sbr.rel target = $region38
              $region43: #{graph_convolution.3} parent=35 // loop_exit
                _
            $region36: #{graph_convolution.3} parent=27 // pred_fallthru
              _
          $region28: #{graph_convolution.3} parent=23 // pred_fallthru
            _
          %275 = vnop
        $region24: #{graph_convolution.3} parent=19 // pred_fallthru
          _
        // Predicated region
        $region62: #{graph_convolution.3} parent=19 // pred_check
          %p276 = pneg %p78
        $region63: #{graph_convolution.3} parent=19 // pred_check_branch
          %278 = sbr.rel (%p276) target = $region65
        $region64: #{graph_convolution.3} parent=19 // pred_region
          %s279 = smul.u32 16, %s18
          %p280 = scmp.lt.s32.totalorder %s279, 31
          %s281 = scalar_select %p280, %s279, 31
          %p282 = scmp.lt.s32.totalorder %s17, 0
          %s283 = scalar_select %p282, %s17, 0
          %s284 = sadd.s32 %s283, %s281
          %s285 = smul.addr %s284, 4
          %s286 = scalar_lea.vmem %s1, %s285
          %s287 = smul.u32 16, %s18
        $region65: #{graph_convolution.3} parent=19 // pred_fallthru
          _
      $region20: #{graph_convolution.3} parent=5 // pred_fallthru
        _
      %p288 = scmp.le.s32.totalorder 1, %s9
      %p289 = scmp.lt.s32.totalorder %s9, 5
      %p290 = pnand %p288, %p289
      %p291 = pneg %p290
      // Predicated region
      $region66: #{graph_convolution.3} parent=5 // pred_check
        _
      $region67: #{graph_convolution.3} parent=5 // pred_check_branch
        %293 = sbr.rel (%p290) target = $region69
      $region68: #{graph_convolution.3} parent=5 // pred_region
        %s294 = ssub.s32 %s9, 1
        %s295 = sand.u32 %s43, 1
        %s296 = sand.u32 %s43, 1
        %s297 = smul.addr %s296, 64
        %s298 = scalar_lea.vmem [#allocation2], %s297
        // Predicated region
        $region70: #{graph_convolution.3} parent=68 // pred_check
          %p299 = pneg %p56
        $region71: #{graph_convolution.3} parent=68 // pred_check_branch
          %301 = sbr.rel (%p299) target = $region73
        $region72: #{graph_convolution.3} parent=68 // pred_region
          _
        $region73: #{graph_convolution.3} parent=68 // pred_fallthru
          _
        %s302 = sand.u32 %s43, 1
        %s303 = sand.u32 %s43, 1
        %s304 = smul.addr %s303, 64
        %s305 = scalar_lea.vmem [#allocation2], %s304
        %p306 = pneg %p56
        %p307 = pneg %p53
        %s308 = smul.u32 16, %s21
        %p309 = scmp.lt.s32.totalorder %s308, 31
        %s310 = scalar_select %p309, %s308, 31
        %p311 = scmp.lt.s32.totalorder %s20, 0
        %s312 = scalar_select %p311, %s20, 0
        %s313 = sadd.s32 %s312, %s310
        %s314 = smul.addr %s313, 4
        %s315 = scalar_lea.vmem %s1, %s314
        %p316 = pneg %p84
        %p317 = pneg %p81
        %p318 = scmp.lt.s32.totalorder %s20, 0
        %s319 = scalar_select %p318, %s20, 0
        %s320 = scalar_lea.vmem %s2, %s319
        %p321 = pneg %p110
        %p322 = pneg %p107
        %p323 = pneg %p138
        %p324 = pneg %p135
        %s325 = smul.u32 16, %s19
        %p326 = scmp.lt.s32.totalorder %s325, 31
        %s327 = scalar_select %p326, %s325, 31
        %p328 = scmp.lt.s32.totalorder %s20, 0
        %s329 = scalar_select %p328, %s20, 0
        %s330 = sadd.s32 %s329, %s327
        %s331 = smul.addr %s330, 8
        %s332 = scalar_lea.vmem %s3, %s331
        %s333 = smul.u32 16, %s19
        %s334 = smul.u32 16, %s21
        %p335 = scmp.lt.s32.totalorder %s334, 31
        %s336 = scalar_select %p335, %s334, 31
        %p337 = scmp.lt.s32.totalorder %s20, 0
        %s338 = scalar_select %p337, %s20, 0
        %s339 = sadd.s32 %s338, %s336
        %s340 = smul.addr %s339, 4
        %s341 = scalar_lea.vmem %s1, %s340
        %s342 = smul.u32 16, %s21
        %p343 = scmp.lt.s32.totalorder %s20, 0
        %s344 = scalar_select %p343, %s20, 0
        %s345 = scalar_lea.vmem %s2, %s344
        %s346 = smul.u32 16, %s19
        %p347 = scmp.lt.s32.totalorder %s346, 31
        %s348 = scalar_select %p347, %s346, 31
        %p349 = scmp.lt.s32.totalorder %s20, 0
        %s350 = scalar_select %p349, %s20, 0
        %s351 = sadd.s32 %s350, %s348
        %s352 = smul.addr %s351, 8
        %s353 = scalar_lea.vmem %s3, %s352
        %s354 = smul.u32 16, %s19
        %p356 = scmp.eq.s32.totalorder %s21, 0
        // Predicated region
        $region74: #{graph_convolution.3} parent=68 // pred_check
          %p357 = pneg %p356
        $region75: #{graph_convolution.3} parent=68 // pred_check_branch
          %359 = sbr.rel (%p357) target = $region77
        $region76: #{graph_convolution.3} parent=68 // pred_region
          %v360 = vld [vmem:[%s345] sm:$0x1]
          %v362 = vlaneseq
          %v363 = vshrl.u32 %v362, 7
          %v364 = vsub.s32 0, %v363
          %v365 = vrot.slane %v360, %v364
          %367 = vst [vmem:[%s353] sm:$0xff] %v365
          %368 = vst [vmem:[%s353 + $0x8] sm:$0xff] %v365
          %369 = vst [vmem:[%s353 + $0x10] sm:$0xff] %v365
          %370 = vst [vmem:[%s353 + $0x18] sm:$0xff] %v365
          %371 = vst [vmem:[%s353 + $0x20] sm:$0xff] %v365
          %372 = vst [vmem:[%s353 + $0x28] sm:$0xff] %v365
          %373 = vst [vmem:[%s353 + $0x30] sm:$0xff] %v365
          %374 = vst [vmem:[%s353 + $0x38] sm:$0xff] %v365
          %375 = vst [vmem:[%s353 + $0x40] sm:$0xff] %v365
          %376 = vst [vmem:[%s353 + $0x48] sm:$0xff] %v365
          %377 = vst [vmem:[%s353 + $0x50] sm:$0xff] %v365
          %378 = vst [vmem:[%s353 + $0x58] sm:$0xff] %v365
          %379 = vst [vmem:[%s353 + $0x60] sm:$0xff] %v365
          %380 = vst [vmem:[%s353 + $0x68] sm:$0xff] %v365
          %381 = vst [vmem:[%s353 + $0x70] sm:$0xff] %v365
          %382 = vst [vmem:[%s353 + $0x78] sm:$0xff] %v365
        $region77: #{graph_convolution.3} parent=68 // pred_fallthru
          _
        %v383 = vld [vmem:[%s353] sm:$0xff]
        %v384 = vld [vmem:[%s353 + $0x8] sm:$0xff]
        %v385 = vld [vmem:[%s353 + $0x10] sm:$0xff]
        %v386 = vld [vmem:[%s353 + $0x18] sm:$0xff]
        %v387 = vld [vmem:[%s353 + $0x20] sm:$0xff]
        %v388 = vld [vmem:[%s353 + $0x28] sm:$0xff]
        %v389 = vld [vmem:[%s353 + $0x30] sm:$0xff]
        %v390 = vld [vmem:[%s353 + $0x38] sm:$0xff]
        %v391 = vld [vmem:[%s353 + $0x40] sm:$0xff]
        %v392 = vld [vmem:[%s353 + $0x48] sm:$0xff]
        %v393 = vld [vmem:[%s353 + $0x50] sm:$0xff]
        %v394 = vld [vmem:[%s353 + $0x58] sm:$0xff]
        %v395 = vld [vmem:[%s353 + $0x60] sm:$0xff]
        %v396 = vld [vmem:[%s353 + $0x68] sm:$0xff]
        %v397 = vld [vmem:[%s353 + $0x70] sm:$0xff]
        %v398 = vld [vmem:[%s353 + $0x78] sm:$0xff]
        %v399 = vld [vmem:[%s298] sm:$0xf]
        %v400 = vld [vmem:[%s298 + $0x4] sm:$0xf]
        %v401 = vld [vmem:[%s298 + $0x8] sm:$0xf]
        %v402 = vld [vmem:[%s298 + $0xc] sm:$0xf]
        %v403 = vld [vmem:[%s298 + $0x10] sm:$0xf]
        %v404 = vld [vmem:[%s298 + $0x14] sm:$0xf]
        %v405 = vld [vmem:[%s298 + $0x18] sm:$0xf]
        %v406 = vld [vmem:[%s298 + $0x1c] sm:$0xf]
        %v407 = vld [vmem:[%s298 + $0x20] sm:$0xf]
        %v408 = vld [vmem:[%s298 + $0x24] sm:$0xf]
        %v409 = vld [vmem:[%s298 + $0x28] sm:$0xf]
        %v410 = vld [vmem:[%s298 + $0x2c] sm:$0xf]
        %v411 = vld [vmem:[%s298 + $0x30] sm:$0xf]
        %v412 = vld [vmem:[%s298 + $0x34] sm:$0xf]
        %v413 = vld [vmem:[%s298 + $0x38] sm:$0xf]
        %v414 = vld [vmem:[%s298 + $0x3c] sm:$0xf]
        %v415 = vld [vmem:[%s341] sm:$0xf]
        %v416 = vld [vmem:[%s341 + $0x4] sm:$0xf]
        %v417 = vld [vmem:[%s341 + $0x8] sm:$0xf]
        %v418 = vld [vmem:[%s341 + $0xc] sm:$0xf]
        %v419 = vld [vmem:[%s341 + $0x10] sm:$0xf]
        %v420 = vld [vmem:[%s341 + $0x14] sm:$0xf]
        %v421 = vld [vmem:[%s341 + $0x18] sm:$0xf]
        %v422 = vld [vmem:[%s341 + $0x1c] sm:$0xf]
        %v423 = vld [vmem:[%s341 + $0x20] sm:$0xf]
        %v424 = vld [vmem:[%s341 + $0x24] sm:$0xf]
        %v425 = vld [vmem:[%s341 + $0x28] sm:$0xf]
        %v426 = vld [vmem:[%s341 + $0x2c] sm:$0xf]
        %v427 = vld [vmem:[%s341 + $0x30] sm:$0xf]
        %v428 = vld [vmem:[%s341 + $0x34] sm:$0xf]
        %v429 = vld [vmem:[%s341 + $0x38] sm:$0xf]
        %v430 = vld [vmem:[%s341 + $0x3c] sm:$0xf]
        %v447 = vunpack.c.l.b16 %v399
        %v448 = vunpack.c.l.b16 %v400
        %v449 = vunpack.c.l.b16 %v401
        %v450 = vunpack.c.l.b16 %v402
        %v451 = vunpack.c.l.b16 %v403
        %v452 = vunpack.c.l.b16 %v404
        %v453 = vunpack.c.l.b16 %v405
        %v454 = vunpack.c.l.b16 %v406
        %v455 = vunpack.c.l.b16 %v407
        %v456 = vunpack.c.l.b16 %v408
        %v457 = vunpack.c.l.b16 %v409
        %v458 = vunpack.c.l.b16 %v410
        %v459 = vunpack.c.l.b16 %v411
        %v460 = vunpack.c.l.b16 %v412
        %v461 = vunpack.c.l.b16 %v413
        %v462 = vunpack.c.l.b16 %v414
        %v463 = vpack.c.b16 %v448, %v447
        %v464 = vpack.c.b16 %v450, %v449
        %v465 = vpack.c.b16 %v452, %v451
        %v466 = vpack.c.b16 %v454, %v453
        %v467 = vpack.c.b16 %v456, %v455
        %v468 = vpack.c.b16 %v458, %v457
        %v469 = vpack.c.b16 %v460, %v459
        %v470 = vpack.c.b16 %v462, %v461
        %v495 = vunpack.c.l.b16 %v415
        %v496 = vunpack.c.l.b16 %v416
        %v497 = vunpack.c.l.b16 %v417
        %v498 = vunpack.c.l.b16 %v418
        %v499 = vunpack.c.l.b16 %v419
        %v500 = vunpack.c.l.b16 %v420
        %v501 = vunpack.c.l.b16 %v421
        %v502 = vunpack.c.l.b16 %v422
        %v503 = vunpack.c.l.b16 %v423
        %v504 = vunpack.c.l.b16 %v424
        %v505 = vunpack.c.l.b16 %v425
        %v506 = vunpack.c.l.b16 %v426
        %v507 = vunpack.c.l.b16 %v427
        %v508 = vunpack.c.l.b16 %v428
        %v509 = vunpack.c.l.b16 %v429
        %v510 = vunpack.c.l.b16 %v430
        %v511 = vpack.c.b16 %v496, %v495
        %v512 = vpack.c.b16 %v498, %v497
        %v513 = vpack.c.b16 %v500, %v499
        %v514 = vpack.c.b16 %v502, %v501
        %v515 = vpack.c.b16 %v504, %v503
        %v516 = vpack.c.b16 %v506, %v505
        %v517 = vpack.c.b16 %v508, %v507
        %v518 = vpack.c.b16 %v510, %v509
        %527 = vmatprep.subr.bf16.mxu0 0
        %528 = vmatpush1.bf16.msra.mxu0 %v518
        %529 = vmatprep.subr.bf16.mxu0 0
        %530 = vmatpush1.bf16.msra.mxu0 %v517
        %531 = vmatprep.subr.bf16.mxu0 0
        %532 = vmatpush1.bf16.msra.mxu0 %v516
        %533 = vmatprep.subr.bf16.mxu0 0
        %534 = vmatpush1.bf16.msra.mxu0 %v515
        %535 = vmatprep.subr.bf16.mxu0 0
        %536 = vmatpush1.bf16.msra.mxu0 %v514
        %537 = vmatprep.subr.bf16.mxu0 0
        %538 = vmatpush1.bf16.msra.mxu0 %v513
        %539 = vmatprep.subr.bf16.mxu0 0
        %540 = vmatpush1.bf16.msra.mxu0 %v512
        %541 = vmatprep.subr.bf16.mxu0 0
        %542 = vmatpush1.bf16.msra.mxu0 %v511
        %543 = vmatprep.subr.bf16.mxu0 0
        %544 = vmatpush2.bf16.msra.mxu0 0
        %545 = vmatprep.subr.bf16.mxu0 0
        %546 = vmatpush2.bf16.msra.mxu0 0
        %547 = vmatprep.subr.bf16.mxu0 0
        %548 = vmatpush2.bf16.msra.mxu0 0
        %549 = vmatprep.subr.bf16.mxu0 0
        %550 = vmatpush2.bf16.msra.mxu0 0
        %551 = vmatprep.subr.bf16.mxu0 0
        %552 = vmatpush2.bf16.msra.mxu0 0
        %553 = vmatprep.subr.bf16.mxu0 0
        %554 = vmatpush2.bf16.msra.mxu0 0
        %555 = vmatprep.subr.bf16.mxu0 0
        %556 = vmatpush2.bf16.msra.mxu0 0
        %557 = vmatprep.subr.bf16.mxu0 0
        %558 = vmatpush2.bf16.msra.mxu0 0
        %559 = vmatprep.mubr.bf16.mxu0 0
        %560 = vmatmul.mubr.bf16.gmra.mxu0 %v463
        %v561 = vpop.f32.mrf.mxu0
        %v562 = vadd.f32 0.0, %v561
        %v563 = vpop.f32.mrf.mxu0
        %v564 = vpop.f32.mrf.mxu0
        %v565 = vadd.f32 0.0, %v564
        %v566 = vpop.f32.mrf.mxu0
        %567 = vmatprep.mubr.bf16.mxu0 0
        %568 = vmatmul.mubr.bf16.gmra.mxu0 %v464
        %v569 = vpop.f32.mrf.mxu0
        %v570 = vadd.f32 0.0, %v569
        %v571 = vpop.f32.mrf.mxu0
        %v572 = vpop.f32.mrf.mxu0
        %v573 = vadd.f32 0.0, %v572
        %v574 = vpop.f32.mrf.mxu0
        %575 = vmatprep.mubr.bf16.mxu0 0
        %576 = vmatmul.mubr.bf16.gmra.mxu0 %v465
        %v577 = vpop.f32.mrf.mxu0
        %v578 = vadd.f32 0.0, %v577
        %v579 = vpop.f32.mrf.mxu0
        %v580 = vpop.f32.mrf.mxu0
        %v581 = vadd.f32 0.0, %v580
        %v582 = vpop.f32.mrf.mxu0
        %583 = vmatprep.mubr.bf16.mxu0 0
        %584 = vmatmul.mubr.bf16.gmra.mxu0 %v466
        %v585 = vpop.f32.mrf.mxu0
        %v586 = vadd.f32 0.0, %v585
        %v587 = vpop.f32.mrf.mxu0
        %v588 = vpop.f32.mrf.mxu0
        %v589 = vadd.f32 0.0, %v588
        %v590 = vpop.f32.mrf.mxu0
        %591 = vmatprep.mubr.bf16.mxu0 0
        %592 = vmatmul.mubr.bf16.gmra.mxu0 %v467
        %v593 = vpop.f32.mrf.mxu0
        %v594 = vadd.f32 0.0, %v593
        %v595 = vpop.f32.mrf.mxu0
        %v596 = vpop.f32.mrf.mxu0
        %v597 = vadd.f32 0.0, %v596
        %v598 = vpop.f32.mrf.mxu0
        %599 = vmatprep.mubr.bf16.mxu0 0
        %600 = vmatmul.mubr.bf16.gmra.mxu0 %v468
        %v601 = vpop.f32.mrf.mxu0
        %v602 = vadd.f32 0.0, %v601
        %v603 = vpop.f32.mrf.mxu0
        %v604 = vpop.f32.mrf.mxu0
        %v605 = vadd.f32 0.0, %v604
        %v606 = vpop.f32.mrf.mxu0
        %607 = vmatprep.mubr.bf16.mxu0 0
        %608 = vmatmul.mubr.bf16.gmra.mxu0 %v469
        %v609 = vpop.f32.mrf.mxu0
        %v610 = vadd.f32 0.0, %v609
        %v611 = vpop.f32.mrf.mxu0
        %v612 = vpop.f32.mrf.mxu0
        %v613 = vadd.f32 0.0, %v612
        %v614 = vpop.f32.mrf.mxu0
        %615 = vmatprep.mubr.bf16.mxu0 0
        %616 = vmatmul.mubr.bf16.gmra.mxu0 %v470
        %v617 = vpop.f32.mrf.mxu0
        %v618 = vadd.f32 0.0, %v617
        %v619 = vpop.f32.mrf.mxu0
        %v620 = vpop.f32.mrf.mxu0
        %v621 = vadd.f32 0.0, %v620
        %v622 = vpop.f32.mrf.mxu0
        %623 = vdwg.mxu0
        %v624 = vadd.f32 %v383, %v562
        %v625 = vadd.f32 %v384, %v565
        %v626 = vadd.f32 %v385, %v570
        %v627 = vadd.f32 %v386, %v573
        %v628 = vadd.f32 %v387, %v578
        %v629 = vadd.f32 %v388, %v581
        %v630 = vadd.f32 %v389, %v586
        %v631 = vadd.f32 %v390, %v589
        %v632 = vadd.f32 %v391, %v594
        %v633 = vadd.f32 %v392, %v597
        %v634 = vadd.f32 %v393, %v602
        %v635 = vadd.f32 %v394, %v605
        %v636 = vadd.f32 %v395, %v610
        %v637 = vadd.f32 %v396, %v613
        %v638 = vadd.f32 %v397, %v618
        %v639 = vadd.f32 %v398, %v621
        %640 = vst [vmem:[%s353] sm:$0xff] %v624
        %641 = vst [vmem:[%s353 + $0x8] sm:$0xff] %v625
        %642 = vst [vmem:[%s353 + $0x10] sm:$0xff] %v626
        %643 = vst [vmem:[%s353 + $0x18] sm:$0xff] %v627
        %644 = vst [vmem:[%s353 + $0x20] sm:$0xff] %v628
        %645 = vst [vmem:[%s353 + $0x28] sm:$0xff] %v629
        %646 = vst [vmem:[%s353 + $0x30] sm:$0xff] %v630
        %647 = vst [vmem:[%s353 + $0x38] sm:$0xff] %v631
        %648 = vst [vmem:[%s353 + $0x40] sm:$0xff] %v632
        %649 = vst [vmem:[%s353 + $0x48] sm:$0xff] %v633
        %650 = vst [vmem:[%s353 + $0x50] sm:$0xff] %v634
        %651 = vst [vmem:[%s353 + $0x58] sm:$0xff] %v635
        %652 = vst [vmem:[%s353 + $0x60] sm:$0xff] %v636
        %653 = vst [vmem:[%s353 + $0x68] sm:$0xff] %v637
        %654 = vst [vmem:[%s353 + $0x70] sm:$0xff] %v638
        %655 = vst [vmem:[%s353 + $0x78] sm:$0xff] %v639
        %s656 = smul.u32 16, %s19
        %p657 = scmp.lt.s32.totalorder %s656, 31
        %s658 = scalar_select %p657, %s656, 31
        %p659 = scmp.lt.s32.totalorder %s20, 0
        %s660 = scalar_select %p659, %s20, 0
        %s661 = sadd.s32 %s660, %s658
        %s662 = smul.addr %s661, 8
        %s663 = scalar_lea.vmem %s3, %s662
        // Predicated region
        $region78: #{graph_convolution.3} parent=68 // pred_check
          %p664 = pneg %p135
        $region79: #{graph_convolution.3} parent=68 // pred_check_branch
          %666 = sbr.rel (%p664) target = $region81
        $region80: #{graph_convolution.3} parent=68 // pred_region
          %s667 = smul.u32 16, %s19
        $region81: #{graph_convolution.3} parent=68 // pred_fallthru
          _
      $region69: #{graph_convolution.3} parent=5 // pred_fallthru
        _
      %p668 = scmp.le.s32.totalorder 2, %s9
      // Predicated region
      $region82: #{graph_convolution.3} parent=5 // pred_check
        %p669 = pneg %p668
      $region83: #{graph_convolution.3} parent=5 // pred_check_branch
        %671 = sbr.rel (%p669) target = $region85
      $region84: #{graph_convolution.3} parent=5 // pred_region
        %s672 = ssub.s32 %s9, 2
        // Predicated region
        $region86: #{graph_convolution.3} parent=84 // pred_check
          %p673 = pneg %p141
        $region87: #{graph_convolution.3} parent=84 // pred_check_branch
          %675 = sbr.rel (%p673) target = $region89
        $region88: #{graph_convolution.3} parent=84 // pred_region
          %s676 = smul.u32 16, %s22
          %p677 = scmp.lt.s32.totalorder %s676, 31
          %s678 = scalar_select %p677, %s676, 31
          %p679 = scmp.lt.s32.totalorder %s23, 0
          %s680 = scalar_select %p679, %s23, 0
          %s681 = sadd.s32 %s680, %s678
          %s682 = smul.addr %s681, 8
          %s683 = scalar_lea.vmem %s3, %s682
        $region89: #{graph_convolution.3} parent=84 // pred_fallthru
          _
      $region85: #{graph_convolution.3} parent=5 // pred_fallthru
        _
    $region6: #{graph_convolution.3} parent=1 // loop_footer
      %s13 = sadd.s32 1, %s9
    $region7: #{graph_convolution.3} parent=1 // loop_footer_branch
      %8 = sbr.rel target = $region3
    $region8: #{graph_convolution.3} parent=1 // loop_exit
      _

</llo_original>
